<compile_context>
chip_gen: v7x
topology: tpu7x:2x2x1
jax: 0.10.0
libtpu: 0.0.40
codegen_flags: <defaults>
</compile_context>

<pallas_src>
import numpy as np
import jax
import jax.numpy as jnp
from jax import lax
from jax.experimental import pallas as pl
from jax.experimental.pallas import tpu as pltpu


def _round_up(x, m):
    return (x + m - 1) // m * m


# -----------------------------------------------------------------------------
# Kernel 1: row-tiled (N, K) @ (K, M) + bias, with M a multiple of 128.
# -----------------------------------------------------------------------------
def _linear_bias_kernel(x_ref, w_ref, b_ref, o_ref):
    acc = jnp.dot(x_ref[...], w_ref[...], preferred_element_type=jnp.float32)
    o_ref[...] = (acc + b_ref[...]).astype(o_ref.dtype)


def _linear_lane_dense(x, w_t, b, *, tile_n=512):
    """y = x @ w_t + b.  w_t: (K, M) pre-transposed, M % 128 == 0 (lane-dense output).

    Rows are tiled (tile_n, multiple of 8) so BlockSpec double-buffers the activation
    DMA; the row axis is "parallel" (megacore).  VMEM at tile_n=512:
    2*(512*K + 512*M)*4 bytes ≈ 1.3 MiB for K<=64, M<=256 — well under scoped VMEM.
    """
    N, K = x.shape
    M = w_t.shape[1]
    assert M % 128 == 0, "pad output features to a multiple of 128 for lane-dense stores"

    n_pad = _round_up(max(N, 8), 8)
    tile_n = min(tile_n, n_pad)
    n_pad = _round_up(n_pad, tile_n)
    if n_pad != N:
        x = jnp.pad(x, ((0, n_pad - N), (0, 0)))
    b2 = b.reshape(1, M)

    out = pl.pallas_call(
        _linear_bias_kernel,
        out_shape=jax.ShapeDtypeStruct((n_pad, M), jnp.float32),
        grid_spec=pl.GridSpec(
            grid=(n_pad // tile_n,),
            in_specs=[
                pl.BlockSpec((tile_n, K), lambda i: (i, 0)),
                pl.BlockSpec((K, M), lambda i: (0, 0)),   # resident weights
                pl.BlockSpec((1, M), lambda i: (0, 0)),   # resident bias
            ],
            out_specs=pl.BlockSpec((tile_n, M), lambda i: (i, 0)),
        ),
        compiler_params=pltpu.CompilerParams(
            dimension_semantics=("parallel",),
        ),
    )(x, w_t, b2)
    return out[:N]


# -----------------------------------------------------------------------------
# Kernel 2: bidirectional LSTM recurrence over padded (T, B, ·) sequences, with the
# class projection fused in.  gates_ref holds the precomputed input projections:
# [..., :4H] forward gates, [..., 4H:] backward gates (torch gate order i, f, g, o;
# b_ih + b_hh already folded in).  The projection weight is split per direction so
# forward writes partial logits and backward accumulates into them (lane-dense Cpad).
# -----------------------------------------------------------------------------
def _bilstm_proj_kernel(gates_ref, whh_f_ref, whh_b_ref, mask_ref,
                        w_pf_ref, w_pb_ref, b_p_ref, out_ref):
    T, B, _ = gates_ref.shape
    H = whh_f_ref.shape[0]
    G = 4 * H

    def cell(g, h, c, m):
        i = jax.nn.sigmoid(g[:, 0 * H:1 * H])
        f = jax.nn.sigmoid(g[:, 1 * H:2 * H])
        gg = jnp.tanh(g[:, 2 * H:3 * H])
        o = jax.nn.sigmoid(g[:, 3 * H:4 * H])
        c_new = f * c + i * gg
        h_new = o * jnp.tanh(c_new)
        # Padded timesteps (mask == 0) keep the previous state, so the backward
        # direction starts from a zero state at each sequence's true last element
        # (equivalent to pack_sequence never showing the LSTM the padding).
        c_new = jnp.where(m > 0.0, c_new, c)
        h_new = jnp.where(m > 0.0, h_new, h)
        return h_new, c_new

    h0 = jnp.zeros((B, H), jnp.float32)
    c0 = jnp.zeros((B, H), jnp.float32)

    def fwd_step(t, carry):
        h, c = carry
        g = gates_ref[t][:, :G] + jnp.dot(h, whh_f_ref[...],
                                          preferred_element_type=jnp.float32)
        h, c = cell(g, h, c, mask_ref[t])
        # Forward-direction partial logits (128-lane, lane-dense store).
        out_ref[t] = (jnp.dot(h, w_pf_ref[...], preferred_element_type=jnp.float32)
                      + b_p_ref[...]).astype(out_ref.dtype)
        return (h, c)

    def bwd_step(k, carry):
        t = T - 1 - k
        h, c = carry
        g = gates_ref[t][:, G:] + jnp.dot(h, whh_b_ref[...],
                                          preferred_element_type=jnp.float32)
        h, c = cell(g, h, c, mask_ref[t])
        # Accumulate backward-direction contribution in place (output resident in VMEM).
        out_ref[t] = out_ref[t] + jnp.dot(h, w_pb_ref[...],
                                          preferred_element_type=jnp.float32
                                          ).astype(out_ref.dtype)
        return (h, c)

    # Short, fixed trip-count loops: unroll for LLO scheduler visibility.
    lax.fori_loop(0, T, fwd_step, (h0, c0), unroll=True)
    lax.fori_loop(0, T, bwd_step, (h0, c0), unroll=True)


# -----------------------------------------------------------------------------
# Parameter packing (done once, outside the hot path) + forward wrapper.
# -----------------------------------------------------------------------------
def pack_lstm_decoder_params(p):
    """Repack torch-layout LSTMDecoder params into kernel layout: pre-transposed,
    fwd/bwd input projections fused into one lane-dense (D, 8H) matrix, b_ih+b_hh
    folded into one bias, projection split per direction and zero-padded to 128 lanes."""
    H = p["W_hh_f"].shape[1]
    C = p["W_p"].shape[0]
    c_pad = _round_up(C, 128)
    w_pf = jnp.zeros((H, c_pad), jnp.float32).at[:, :C].set(p["W_p"][:, :H].T)
    w_pb = jnp.zeros((H, c_pad), jnp.float32).at[:, :C].set(p["W_p"][:, H:].T)
    b_p = jnp.zeros((1, c_pad), jnp.float32).at[0, :C].set(p["b_p"])
    return {
        "H": H,
        "C": C,
        "c_pad": c_pad,
        "w_ih_cat_t": jnp.concatenate([p["W_ih_f"].T, p["W_ih_b"].T], axis=1),  # (D, 8H)
        "b_gates": jnp.concatenate([p["b_ih_f"] + p["b_hh_f"],
                                    p["b_ih_b"] + p["b_hh_b"]]),                # (8H,)
        "w_hh_f_t": jnp.asarray(p["W_hh_f"].T),  # (H, 4H)
        "w_hh_b_t": jnp.asarray(p["W_hh_b"].T),  # (H, 4H)
        "w_pf_t": w_pf,                          # (H, Cpad)
        "w_pb_t": w_pb,                          # (H, Cpad)
        "b_p2": b_p,                             # (1, Cpad)
    }


def lstm_decoder_forward(node_embedding, lengths, kp):
    """Forward pass of LSTMDecoder (type='LSTMB', lstm_layers=1, no LayerNorm).

    node_embedding: (N, D) float32, per-graph node sequences concatenated (PyG order).
    lengths: static host-side python ints per sequence (derived from `batch`).
    Returns a list of (len_b, n_classes) arrays, matching the torch forward's output list.
    """
    # TODO(synk): LSTMnormalization=True (LayerNorm), dropout>0 and lstm_layers>1 branches
    # are not implemented; module defaults (False, 0.0, 1) are matched exactly.
    D = node_embedding.shape[1]
    H = kp["H"]
    C = kp["C"]
    B = len(lengths)
    T = int(max(lengths))

    # unbatch + pad to time-major (T, B, D)  — equivalent of unbatch + pack_sequence.
    x_pad = jnp.zeros((B, T, D), jnp.float32)
    off = 0
    for b, L in enumerate(lengths):
        x_pad = x_pad.at[b, :L].set(node_embedding[off:off + L])
        off += L
    x_tm = jnp.transpose(x_pad, (1, 0, 2)).reshape(T * B, D)

    # Kernel 1: fused input projections for both directions (output 8H = 256 lanes).
    gates = _linear_lane_dense(x_tm, kp["w_ih_cat_t"], kp["b_gates"]).reshape(T, B, 8 * H)

    # valid-timestep mask (T, B, 1).
    lens = jnp.asarray(lengths, jnp.int32)
    mask = (jnp.arange(T, dtype=jnp.int32)[:, None] < lens[None, :]).astype(jnp.float32)
    mask = mask[:, :, None]

    # Kernel 2: bidirectional recurrence + fused class projection (single invocation,
    # whole problem resident in VMEM; output stores are lane-dense Cpad = 128).
    logits_pad = pl.pallas_call(
        _bilstm_proj_kernel,
        out_shape=jax.ShapeDtypeStruct((T, B, kp["c_pad"]), jnp.float32),
    )(gates, kp["w_hh_f_t"], kp["w_hh_b_t"], mask,
      kp["w_pf_t"], kp["w_pb_t"], kp["b_p2"])

    proj = logits_pad[:, :, :C].transpose(1, 0, 2)  # (B, T, C)
    return [proj[b, :L] for b, L in enumerate(lengths)]


# -----------------------------------------------------------------------------
# Pure-JAX reference (mirrors torch nn.LSTM bidirectional + nn.Linear, per sequence).
# -----------------------------------------------------------------------------
def _ref_lstm_dir(seq, W_ih, W_hh, b_ih, b_hh, reverse):
    H = W_hh.shape[1]
    L = seq.shape[0]
    h = jnp.zeros((H,), jnp.float32)
    c = jnp.zeros((H,), jnp.float32)
    order = range(L - 1, -1, -1) if reverse else range(L)
    hs = [None] * L
    for t in order:
        g = seq[t] @ W_ih.T + b_ih + h @ W_hh.T + b_hh
        i = jax.nn.sigmoid(g[:H])
        f = jax.nn.sigmoid(g[H:2 * H])
        gg = jnp.tanh(g[2 * H:3 * H])
        o = jax.nn.sigmoid(g[3 * H:])
        c = f * c + i * gg
        h = o * jnp.tanh(c)
        hs[t] = h
    return jnp.stack(hs)


def reference_forward(node_embedding, lengths, p):
    outs = []
    off = 0
    for L in lengths:
        seq = node_embedding[off:off + L]
        off += L
        hf = _ref_lstm_dir(seq, p["W_ih_f"], p["W_hh_f"], p["b_ih_f"], p["b_hh_f"], False)
        hb = _ref_lstm_dir(seq, p["W_ih_b"], p["W_hh_b"], p["b_ih_b"], p["b_hh_b"], True)
        hcat = jnp.concatenate([hf, hb], axis=-1)
        outs.append(hcat @ p["W_p"].T + p["b_p"])
    return outs


if __name__ == "__main__":
    n_classes = 6
    gcn_hidden = 32    # GCN_hidden_dim (LSTM input size)
    lstm_hidden = 32   # LSTM_hidden_dim (bidirectional -> proj input 2*H = 64)
    lengths = [5, 8]   # two graphs / node sequences
    batch = np.concatenate([np.full(L, g, dtype=np.int32) for g, L in enumerate(lengths)])
    n_nodes = int(batch.shape[0])

    key = jax.random.PRNGKey(0)
    ks = jax.random.split(key, 8)

    def xavier_normal(k, shape):
        fan_out, fan_in = shape
        std = (2.0 / (fan_in + fan_out)) ** 0.5
        return std * jax.random.normal(k, shape, jnp.float32)

    bound = 1.0 / (2 * lstm_hidden) ** 0.5
    params = {
        # torch layout: weight_ih (4H, D), weight_hh (4H, H); gate order [i, f, g, o];
        # init_LSTM(): xavier_normal_ weights, zero biases.
        "W_ih_f": xavier_normal(ks[0], (4 * lstm_hidden, gcn_hidden)),
        "W_hh_f": xavier_normal(ks[1], (4 * lstm_hidden, lstm_hidden)),
        "b_ih_f": jnp.zeros((4 * lstm_hidden,), jnp.float32),
        "b_hh_f": jnp.zeros((4 * lstm_hidden,), jnp.float32),
        "W_ih_b": xavier_normal(ks[2], (4 * lstm_hidden, gcn_hidden)),
        "W_hh_b": xavier_normal(ks[3], (4 * lstm_hidden, lstm_hidden)),
        "b_ih_b": jnp.zeros((4 * lstm_hidden,), jnp.float32),
        "b_hh_b": jnp.zeros((4 * lstm_hidden,), jnp.float32),
        # proj: nn.Linear(2H, n_classes) default uniform init.
        "W_p": jax.random.uniform(ks[4], (n_classes, 2 * lstm_hidden), jnp.float32, -bound, bound),
        "b_p": jax.random.uniform(ks[5], (n_classes,), jnp.float32, -bound, bound),
    }

    node_embedding = jax.random.normal(ks[6], (n_nodes, gcn_hidden), jnp.float32)
    x = {"node_embedding": node_embedding}          # forward's dict input
    seq_lengths = np.bincount(batch).tolist()       # host-side static lengths (pack_sequence equivalent)

    kp = pack_lstm_decoder_params(params)           # one-time repack; no per-call weight.T
    out_list = lstm_decoder_forward(x["node_embedding"], seq_lengths, kp)
    out_list = [jax.block_until_ready(o) for o in out_list]

    ref_list = reference_forward(node_embedding, seq_lengths, params)
    max_err = 0.0
    for o, r in zip(out_list, ref_list):
        assert o.shape == r.shape, (o.shape, r.shape)
        max_err = max(max_err, float(jnp.max(jnp.abs(o - r))))
    assert max_err < 2e-3, f"max abs error {max_err}"
    print("KERNEL_OK")
</pallas_src>

<mosaic_0001>
module attributes {stable_mosaic.version = 11 : i64} {
  func.func @_linear_bias_kernel(%arg0: i32, %arg1: memref<16x32xf32, #tpu.memory_space<vmem>>, %arg2: memref<32x256xf32, #tpu.memory_space<vmem>>, %arg3: memref<1x256xf32, #tpu.memory_space<vmem>>, %arg4: memref<16x256xf32, #tpu.memory_space<vmem>>) attributes {dimension_semantics = [#tpu.dimension_semantics<parallel>], iteration_bounds = array<i64: 1>, scalar_prefetch = 0 : i64, scratch_operands = 0 : i64, tpu.core_type = #tpu.core_type<tc>, window_params = [{transform_indices = @transform_0, window_bounds = array<i64: 16, 32>}, {pipeline_mode = #tpu.pipeline_mode<synchronous>, transform_indices = @transform_1, window_bounds = array<i64: 32, 256>}, {pipeline_mode = #tpu.pipeline_mode<synchronous>, transform_indices = @transform_2, window_bounds = array<i64: 1, 256>}, {transform_indices = @transform_3, window_bounds = array<i64: 16, 256>}]} {
    %c0 = arith.constant 0 : index
    %c0_0 = arith.constant 0 : index
    %0 = vector.load %arg1[%c0, %c0_0] : memref<16x32xf32, #tpu.memory_space<vmem>>, vector<16x32xf32>
    %c0_1 = arith.constant 0 : index
    %c0_2 = arith.constant 0 : index
    %1 = vector.load %arg2[%c0_1, %c0_2] : memref<32x256xf32, #tpu.memory_space<vmem>>, vector<32x256xf32>
    %cst = arith.constant dense<0.000000e+00> : vector<16x256xf32>
    %2 = tpu.matmul %0, %1, %cst {dimension_numbers = #tpu.dot_dimension_numbers<[1], [0], [0], [1], [0, 0, 1, 1], [], []>} : vector<16x32xf32>, vector<32x256xf32>, vector<16x256xf32> -> vector<16x256xf32>
    %c0_3 = arith.constant 0 : index
    %c0_4 = arith.constant 0 : index
    %3 = vector.load %arg3[%c0_3, %c0_4] : memref<1x256xf32, #tpu.memory_space<vmem>>, vector<1x256xf32>
    %4 = vector.broadcast %3 : vector<1x256xf32> to vector<16x256xf32>
    %5 = arith.addf %2, %4 : vector<16x256xf32>
    %c0_5 = arith.constant 0 : index
    %c0_6 = arith.constant 0 : index
    %6 = vector.load %arg4[%c0_5, %c0_6] : memref<16x256xf32, #tpu.memory_space<vmem>>, vector<16x256xf32>
    tpu.vector_store %arg4[%c0_5, %c0_6], %5 {strides = array<i32>} : memref<16x256xf32, #tpu.memory_space<vmem>>, vector<16x256xf32>,
    return
  }
  func.func @transform_0(%arg0: i32) -> (i32, i32) {
    %c0_i32 = arith.constant 0 : i32
    %c0_i32_0 = arith.constant 0 : i32
    return %arg0, %c0_i32 : i32, i32
  }
  func.func @transform_1(%arg0: i32) -> (i32, i32) {
    %c0_i32 = arith.constant 0 : i32
    %c0_i32_0 = arith.constant 0 : i32
    %c0_i32_1 = arith.constant 0 : i32
    return %c0_i32, %c0_i32_0 : i32, i32
  }
  func.func @transform_2(%arg0: i32) -> (i32, i32) {
    %c0_i32 = arith.constant 0 : i32
    %c0_i32_0 = arith.constant 0 : i32
    %c0_i32_1 = arith.constant 0 : i32
    return %c0_i32, %c0_i32_0 : i32, i32
  }
  func.func @transform_3(%arg0: i32) -> (i32, i32) {
    %c0_i32 = arith.constant 0 : i32
    %c0_i32_0 = arith.constant 0 : i32
    return %arg0, %c0_i32 : i32, i32
  }
}

</mosaic_0001>

<llo_original>
// kernel: tpu_custom_call.1
$region0: #{tpu_custom_call.1}
  #allocation0 [shape = 'u32[]', space=smem, size = 0x4, offset = 0x4, fixed_abs, tag = 'smem constant byte address 0x4 - core index']
  #allocation1 [shape = 'u32[144,128]{1,0:T(1,128)}', space=vmem, size = 0x12000, scoped, tag = 'internal scratch']
  %s0 = inlined_call_operand.hbm [shape: f32[16,32], index: 0, kind: input, shape index: {}]
  %s1 = inlined_call_operand.hbm [shape: f32[32,256], index: 1, kind: input, shape index: {}]
  %s2 = inlined_call_operand.vmem [shape: f32[1,256], index: 2, kind: input, shape index: {}]
  %s3 = inlined_call_operand.hbm [shape: f32[16,256], index: 3, kind: output, shape index: {}]
  %s4 = sld [smem:[#allocation0]]
  $region30: #{tpu_custom_call.1} parent=0
    _
  %s6 = ssub.s32 1, %s4
  %s7 = scalar_select 0, %s6, %s4
  $region1: #{tpu_custom_call.1} parent=0
    #allocation2 [shape = 'u8[8192]{0}', space=vmem, size = 0x2000, scoped, tag = 'input window, operand 0, single buffered']
    #allocation3 [shape = 's32[1]{0}', space=sflag, size = 0x4, scoped, tag = 'scoped memory for tpu_custom_call.1']
    #allocation4 [shape = 's32[1]{0}', space=sflag, size = 0x4, scoped, tag = 'scoped memory for tpu_custom_call.1']
    #allocation5 [shape = 'u8[32768]{0}', space=vmem, size = 0x8000, scoped, tag = 'input window, operand 1, single buffered']
    #allocation6 [shape = 's32[1]{0}', space=sflag, size = 0x4, scoped, tag = 'scoped memory for tpu_custom_call.1']
    #allocation7 [shape = 'u8[16384]{0}', space=vmem, size = 0x4000, scoped, tag = 'output window, operand 0, single buffered']
    %8 = vsyncpa [#allocation3], 0
    %9 = vsyncpa [#allocation6], 0
    %10 = vsyncpa [#allocation4], 0
    // Predicated region
    $region2: #{tpu_custom_call.1} parent=1 // pred_check
      _
    $region3: #{tpu_custom_call.1} parent=1 // pred_check_branch
      %12 = sbr.rel (0) target = $region5
    $region4: #{tpu_custom_call.1} parent=1 // pred_region
      %s14 = ssub.s32 256, 256
      %15 = vsyncadd [#allocation3], %s14
      %s16 = sshll.u32 [#allocation2], 4
      %s17 = int_to_ptr.vmem [resolvable:$true] %s16
      %22 = dma.hbm_to_vmem [thread:$0]  %s0, 256, %s17, [#allocation3], 128, 128, 8
    $region5: #{tpu_custom_call.1} parent=1 // pred_fallthru
      _
    // Predicated region
    $region6: #{tpu_custom_call.1} parent=1 // pred_check
      _
    $region7: #{tpu_custom_call.1} parent=1 // pred_check_branch
      %24 = sbr.rel (0) target = $region9
    $region8: #{tpu_custom_call.1} parent=1 // pred_region
      %s26 = ssub.s32 1024, 1024
      %27 = vsyncadd [#allocation6], %s26
      %s28 = sshll.u32 [#allocation5], 4
      %s29 = int_to_ptr.vmem [resolvable:$true] %s28
      %34 = dma.hbm_to_vmem [thread:$0]  %s1, 1024, %s29, [#allocation6], 256, 256, 16
    $region9: #{tpu_custom_call.1} parent=1 // pred_fallthru
      _
    // Predicated region
    $region10: #{tpu_custom_call.1} parent=1 // pred_check
      _
    $region11: #{tpu_custom_call.1} parent=1 // pred_check_branch
      %36 = sbr.rel (0) target = $region13
    $region12: #{tpu_custom_call.1} parent=1 // pred_region
      _
    $region13: #{tpu_custom_call.1} parent=1 // pred_fallthru
      _
    // Predicated region
    $region14: #{tpu_custom_call.1} parent=1 // pred_check
      _
    $region15: #{tpu_custom_call.1} parent=1 // pred_check_branch
      %38 = sbr.rel (0) target = $region17
    $region16: #{tpu_custom_call.1} parent=1 // pred_region
      %39 = dma.done [#allocation3], 256
    $region17: #{tpu_custom_call.1} parent=1 // pred_fallthru
      _
    // Predicated region
    $region18: #{tpu_custom_call.1} parent=1 // pred_check
      _
    $region19: #{tpu_custom_call.1} parent=1 // pred_check_branch
      %41 = sbr.rel (0) target = $region21
    $region20: #{tpu_custom_call.1} parent=1 // pred_region
      %42 = dma.done [#allocation6], 1024
    $region21: #{tpu_custom_call.1} parent=1 // pred_fallthru
      _
    %v43 = vld [vmem:[#allocation2] sm:$0xff]
    %v44 = vld [vmem:[#allocation2 + $0x8] sm:$0xff]
    %v45 = vld [vmem:[#allocation5] sm:$0xff]
    %v46 = vld [vmem:[#allocation5 + $0x8] sm:$0xff]
    %v47 = vld [vmem:[#allocation5 + $0x10] sm:$0xff]
    %v48 = vld [vmem:[#allocation5 + $0x18] sm:$0xff]
    %v49 = vld [vmem:[#allocation5 + $0x20] sm:$0xff]
    %v50 = vld [vmem:[#allocation5 + $0x28] sm:$0xff]
    %v51 = vld [vmem:[#allocation5 + $0x30] sm:$0xff]
    %v52 = vld [vmem:[#allocation5 + $0x38] sm:$0xff]
    %v53 = vld [vmem:[%s2] sm:$0x3]
    %v55 = vlaneseq
    %v56 = vshrl.u32 %v55, 7
    %v57 = vsub.s32 0, %v56
    %v58 = vrot.slane %v53, %v57
    %v59 = vlaneseq
    %v60 = vshrl.u32 %v59, 7
    %v61 = vsub.s32 1, %v60
    %v62 = vrot.slane %v53, %v61
    %vm65 = vcmask 261120
    %v67 = vsel %vm65, %v43, 0
    %v70 = vsel %vm65, %v44, 0
    %72 = vmatprep.subr.mxu0 %v46
    %73 = vmatpush1.msra.mxu0 %v45
    %74 = vmatprep.subr.mxu0 %v48
    %75 = vmatpush1.msra.mxu0 %v47
    %76 = vmatprep.subr.mxu0 %v50
    %77 = vmatpush1.msra.mxu0 %v49
    %78 = vmatprep.subr.mxu0 %v52
    %79 = vmatpush1.msra.mxu0 %v51
    %80 = vmatprep.subr.mxu0 0.0
    %81 = vmatpush1.msra.mxu0 0.0
    %82 = vmatprep.subr.mxu0 0.0
    %83 = vmatpush1.msra.mxu0 0.0
    %84 = vmatprep.subr.mxu0 0.0
    %85 = vmatpush1.msra.mxu0 0.0
    %86 = vmatprep.subr.mxu0 0.0
    %87 = vmatpush1.msra.mxu0 0.0
    %88 = vmatprep.subr.mxu0 0.0
    %89 = vmatpush1.msra.mxu0 0.0
    %90 = vmatprep.subr.mxu0 0.0
    %91 = vmatpush1.msra.mxu0 0.0
    %92 = vmatprep.subr.mxu0 0.0
    %93 = vmatpush1.msra.mxu0 0.0
    %94 = vmatprep.subr.mxu0 0.0
    %95 = vmatpush1.msra.mxu0 0.0
    %96 = vmatprep.subr.mxu0 0.0
    %97 = vmatpush1.msra.mxu0 0.0
    %98 = vmatprep.subr.mxu0 0.0
    %99 = vmatpush1.msra.mxu0 0.0
    %100 = vmatprep.subr.mxu0 0.0
    %101 = vmatpush1.msra.mxu0 0.0
    %102 = vmatprep.subr.mxu0 0.0
    %103 = vmatpush1.msra.mxu0 0.0
    %104 = vmatprep.subr.mxu0 0.0
    %105 = vmatpush1.msra.mxu0 0.0
    %106 = vmatprep.subr.mxu0 0.0
    %107 = vmatpush1.msra.mxu0 0.0
    %108 = vmatprep.subr.mxu0 0.0
    %109 = vmatpush1.msra.mxu0 0.0
    %110 = vmatprep.subr.mxu0 0.0
    %111 = vmatpush1.msra.mxu0 0.0
    %112 = vmatprep.subr.mxu0 0.0
    %113 = vmatpush1.msra.mxu0 0.0
    %114 = vmatprep.subr.mxu0 0.0
    %115 = vmatpush1.msra.mxu0 0.0
    %116 = vmatprep.subr.mxu0 0.0
    %117 = vmatpush1.msra.mxu0 0.0
    %118 = vmatprep.subr.mxu0 0.0
    %119 = vmatpush1.msra.mxu0 0.0
    %120 = vmatprep.subr.mxu0 0.0
    %121 = vmatpush1.msra.mxu0 0.0
    %122 = vmatprep.subr.mxu0 0.0
    %123 = vmatpush1.msra.mxu0 0.0
    %124 = vmatprep.subr.mxu0 0.0
    %125 = vmatpush1.msra.mxu0 0.0
    %126 = vmatprep.subr.mxu0 0.0
    %127 = vmatpush1.msra.mxu0 0.0
    %128 = vmatprep.subr.mxu0 0.0
    %129 = vmatpush1.msra.mxu0 0.0
    %130 = vmatprep.subr.mxu0 0.0
    %131 = vmatpush1.msra.mxu0 0.0
    %132 = vmatprep.subr.mxu0 0.0
    %133 = vmatpush1.msra.mxu0 0.0
    %134 = vmatprep.subr.mxu0 0.0
    %135 = vmatpush1.msra.mxu0 0.0
    %136 = vmatprep.mubr.f32.mxu0 0.0
    %137 = vmatmul.mubr.f32.gmra.mrb[0].mxu0 %v67
    %v138 = vpop.f32.mrb[0].mxu0
    %v139 = vadd.f32 %v58, %v138
    %v140 = vpop.f32.mrb[0].mxu0
    %v141 = vadd.f32 %v62, %v140
    %142 = vmatprep.mubr.f32.mxu0 0.0
    %143 = vmatmul.mubr.f32.gmra.mrb[0].mxu0 %v70
    %v144 = vpop.f32.mrb[0].mxu0
    %v145 = vadd.f32 %v58, %v144
    %v146 = vpop.f32.mrb[0].mxu0
    %v147 = vadd.f32 %v62, %v146
    %148 = vdwg.mxu0
    %149 = vst [vmem:[#allocation7] sm:$0xff] %v139
    %150 = vst [vmem:[#allocation7 + $0x8] sm:$0xff] %v141
    %151 = vst [vmem:[#allocation7 + $0x10] sm:$0xff] %v145
    %152 = vst [vmem:[#allocation7 + $0x18] sm:$0xff] %v147
    // Predicated region
    $region22: #{tpu_custom_call.1} parent=1 // pred_check
      _
    $region23: #{tpu_custom_call.1} parent=1 // pred_check_branch
      %154 = sbr.rel (0) target = $region25
    $region24: #{tpu_custom_call.1} parent=1 // pred_region
      %s156 = ssub.s32 512, 512
      %157 = vsyncadd [#allocation4], %s156
      %s158 = sshll.u32 [#allocation7], 4
      %s159 = int_to_ptr.vmem [resolvable:$true] %s158
      %164 = dma.vmem_to_hbm [thread:$0]  %s159, 512, %s3, [#allocation4], 256, 256, 16
    $region25: #{tpu_custom_call.1} parent=1 // pred_fallthru
      _
    // Predicated region
    $region26: #{tpu_custom_call.1} parent=1 // pred_check
      _
    $region27: #{tpu_custom_call.1} parent=1 // pred_check_branch
      %166 = sbr.rel (0) target = $region29
    $region28: #{tpu_custom_call.1} parent=1 // pred_region
      %167 = dma.done [#allocation4], 512
    $region29: #{tpu_custom_call.1} parent=1 // pred_fallthru
      _
    %168 = vsyncpa [#allocation3], 1
    %169 = vsyncpa [#allocation6], 1
    %170 = vsyncpa [#allocation4], 1

</llo_original>
